<compile_context>
chip_gen: v7x
topology: tpu7x:2x2x1
jax: 0.10.0
libtpu: 0.0.40
codegen_flags: <defaults>
</compile_context>

<pallas_src>
import functools

import jax
import jax.numpy as jnp
from jax.experimental import pallas as pl
from jax.experimental.pallas import tpu as pltpu


# ---------------- tunables ----------------
_MB = 1024 * 1024
_LANE = 512          # lane-dense last dim (multiple of 128)
_NSHARDS = 2         # leading 'parallel' axis -> 2 TensorCores on v7x


def _cdiv(a, b):
    return -(-a // b)


def _round_up(a, b):
    return _cdiv(a, b) * b


def _min_sublane(dtype):
    """Minimum sublane multiple for the dtype's tiling (8/16/32)."""
    bits = jnp.dtype(dtype).itemsize * 8
    if bits >= 32:
        return 8
    if bits == 16:
        return 16
    return 32


def _tpu_memory_profile():
    """(physical VMEM bytes per TensorCore, target tile bytes for tiled path)."""
    kind = ""
    try:
        kind = jax.devices()[0].device_kind.lower()
    except Exception:
        pass
    if "v7" in kind or "7x" in kind:
        return 64 * _MB, 4 * _MB       # v7x: 64 MiB VMEM, ~3.2 TB/s HBM
    if "v6" in kind or "v5" in kind or "v4" in kind:
        return 128 * _MB, 2 * _MB      # v4/v5e/v6e: 128 MiB VMEM
    return 64 * _MB, 2 * _MB           # unknown: assume the small-VMEM case


# ---------------- kernels ----------------

def _fused_center_kernel(x_ref, o_ref, *, inv_n):
    """Fast path: whole slab resident in VMEM, one pass (2N HBM bytes)."""
    xf = x_ref[...].astype(jnp.float32)
    mean = jnp.sum(xf) * inv_n          # zero padding contributes nothing
    o_ref[...] = (xf - mean).astype(o_ref.dtype)


def _partial_sum_kernel(x_ref, psum_ref, acc_ref, *, steps, rows, tm, mask_rows):
    """Pass 1: per-shard partial sum.

    Accumulate an (8, LANE) vector partial sum each step with pure vreg
    adds; the sublane 8->1 and cross-lane reductions happen only once per
    shard, at the last step.
    """
    k = pl.program_id(1)

    @pl.when(k == 0)
    def _():
        acc_ref[...] = jnp.zeros_like(acc_ref)

    xf = x_ref[...].astype(jnp.float32)
    if mask_rows:
        # Mask rows beyond the true row count: covers both the partial last
        # block and clamped (duplicate) blocks of an over-full shard.
        c = pl.program_id(0)
        row0 = (c * steps + k) * tm                       # unclamped global row
        rid = row0 + jax.lax.broadcasted_iota(jnp.int32, xf.shape, 0)
        xf = jnp.where(rid < rows, xf, 0.0)

    acc_ref[...] += jnp.sum(xf.reshape(-1, 8, xf.shape[-1]), axis=0)

    @pl.when(k == pl.num_programs(1) - 1)
    def _():
        total = jnp.sum(acc_ref[...])
        # Fill the whole (8, 128) output block with the shard's total so the
        # block stays (8, 128)-aligned; pass 2 reads element [c*8, 0].
        psum_ref[...] = jnp.broadcast_to(total, psum_ref.shape)


def _center_kernel(psum_ref, x_ref, o_ref, *, inv_n, nshards):
    """Pass 2: x - mean; mean formed in-kernel from SMEM partial sums."""
    total = psum_ref[0, 0]
    for c in range(1, nshards):
        total = total + psum_ref[c * 8, 0]
    mean = total * inv_n                                   # f32 scalar
    o_ref[...] = (x_ref[...].astype(jnp.float32) - mean).astype(o_ref.dtype)


# ---------------- wrapper ----------------

def center_global_mean(x, *, force_tiled=False):
    """Pallas equivalent of torch `X - X.mean()` (global scalar mean)."""
    orig_shape = x.shape
    n = int(x.size)
    itemsize = jnp.dtype(x.dtype).itemsize
    inv_n = 1.0 / float(n)
    x_flat = x.reshape(-1)

    vmem_cap, tile_target = _tpu_memory_profile()
    sub = _min_sublane(x.dtype)

    # Bytes the fast path keeps resident in VMEM: input slab + output slab
    # (+ an f32 temp when the input is not already f32).
    pad_lane = _round_up(n, _LANE)
    fast_bytes = pad_lane * (2 * itemsize +
                             (0 if jnp.dtype(x.dtype) == jnp.float32 else 4))

    # -------- fast path: whole slab fits in VMEM (2N HBM traffic) --------
    if (not force_tiled) and (fast_bytes + 2 * _MB <= int(0.8 * vmem_cap)):
        padded = pad_lane
        if padded != n:
            x_flat = jnp.pad(x_flat, (0, padded - n))      # zeros: sum unaffected
        x2 = x_flat.reshape(padded // _LANE, _LANE)
        fast_limit = int(min(vmem_cap - 4 * _MB,
                             max(fast_bytes + 8 * _MB, 32 * _MB)))
        out2 = pl.pallas_call(
            functools.partial(_fused_center_kernel, inv_n=inv_n),
            out_shape=jax.ShapeDtypeStruct(x2.shape, x.dtype),
            in_specs=[pl.BlockSpec(memory_space=pltpu.MemorySpace.VMEM)],
            out_specs=pl.BlockSpec(memory_space=pltpu.MemorySpace.VMEM),
            compiler_params=pltpu.CompilerParams(vmem_limit_bytes=fast_limit),
            cost_estimate=pl.CostEstimate(
                flops=2 * padded, transcendentals=0,
                bytes_accessed=2 * padded * itemsize),
        )(x2)
        out_flat = out2.reshape(-1)
        if padded != n:
            out_flat = out_flat[:n]
        return out_flat.reshape(orig_shape)

    # -------- tiled two-pass path (large inputs) --------
    if n % _LANE != 0:
        # Element-level ragged tail: pad flat array (zeros don't change the
        # sum).  Pad to a sublane-aligned row count since we're copying anyway.
        padded = _round_up(n, _LANE * 8)
        x_flat = jnp.pad(x_flat, (0, padded - n))
    else:
        padded = n
    rows = padded // _LANE
    x2 = x_flat.reshape(rows, _LANE)

    # Chip/dtype-aware tile: target ~4 MiB on v7x, ~2 MiB on v5e/v6e.
    tm_cap = max(sub, (tile_target // (_LANE * itemsize)) // sub * sub)
    tm = min(tm_cap, _round_up(_cdiv(rows, _NSHARDS), sub))
    g = _cdiv(rows, tm)                     # total row blocks (last may be partial)
    steps = _cdiv(g, _NSHARDS)              # row blocks per shard

    need_clamp = _NSHARDS * steps > g       # some shard would overshoot g
    need_mask = need_clamp or (rows % tm != 0)

    if need_clamp:
        x_map = lambda c, k: (jnp.minimum(c * steps + k, g - 1), 0)
    else:
        x_map = lambda c, k: (c * steps + k, 0)

    tile_bytes = tm * _LANE * itemsize
    tiled_limit = int(min(vmem_cap - 4 * _MB, max(32 * _MB, 8 * tile_bytes)))

    # Pass 1: per-shard partial sums. Shard axis is 'parallel' (v7x's two
    # TensorCores split it); the reduction axis stays 'arbitrary' and last.
    psums = pl.pallas_call(
        functools.partial(_partial_sum_kernel, steps=steps, rows=rows,
                          tm=tm, mask_rows=need_mask),
        out_shape=jax.ShapeDtypeStruct((_NSHARDS * 8, 128), jnp.float32),
        grid=(_NSHARDS, steps),
        in_specs=[pl.BlockSpec((tm, _LANE), x_map)],
        out_specs=pl.BlockSpec((8, 128), lambda c, k: (c, 0)),
        scratch_shapes=[pltpu.VMEM((8, _LANE), jnp.float32)],
        compiler_params=pltpu.CompilerParams(
            dimension_semantics=("parallel", "arbitrary"),
            vmem_limit_bytes=tiled_limit),
        cost_estimate=pl.CostEstimate(
            flops=padded, transcendentals=0,
            bytes_accessed=padded * itemsize),
    )(x2)

    # Pass 2: elementwise subtraction; partial sums live in SMEM and the
    # mean (and 1/n) is formed inside the kernel -> no glue op in between.
    # Partial last block: OOB reads unused, OOB writes dropped by Pallas.
    out2 = pl.pallas_call(
        functools.partial(_center_kernel, inv_n=inv_n, nshards=_NSHARDS),
        out_shape=jax.ShapeDtypeStruct((rows, _LANE), x.dtype),
        grid=(g,),
        in_specs=[pl.BlockSpec(memory_space=pltpu.MemorySpace.SMEM),
                  pl.BlockSpec((tm, _LANE), lambda i: (i, 0))],
        out_specs=pl.BlockSpec((tm, _LANE), lambda i: (i, 0)),
        compiler_params=pltpu.CompilerParams(
            dimension_semantics=("parallel",),
            vmem_limit_bytes=tiled_limit),
        cost_estimate=pl.CostEstimate(
            flops=2 * padded, transcendentals=0,
            bytes_accessed=2 * padded * itemsize),
    )(psums, x2)

    out_flat = out2.reshape(-1)
    if padded != n:
        out_flat = out_flat[:n]
    return out_flat.reshape(orig_shape)


# ---------------- demo ----------------

if __name__ == "__main__":
    key = jax.random.PRNGKey(0)
    k0, k1, k2 = jax.random.split(key, 3)

    # Small NCHW input consistent with the module's forward (fast path).
    x = jax.random.normal(k0, (2, 4, 16, 16), dtype=jnp.float32)
    y = jax.block_until_ready(center_global_mean(x))
    y_ref = x - jnp.mean(x)
    assert y.shape == x.shape and y.dtype == x.dtype
    assert jnp.allclose(y, y_ref, atol=1e-5, rtol=1e-5)

    # Exercise the tiled two-pass path: ragged shape (masking + duplicate
    # shard block + padded tail).
    xr = jax.random.normal(k1, (2, 3, 15, 17), dtype=jnp.float32)
    yr = jax.block_until_ready(center_global_mean(xr, force_tiled=True))
    assert jnp.allclose(yr, xr - jnp.mean(xr), atol=1e-5, rtol=1e-5)

    # Exercise the tiled path with clean, larger blocks (no masking).
    xb = jax.random.normal(k2, (16, 16, 64, 64), dtype=jnp.float32)
    yb = jax.block_until_ready(center_global_mean(xb, force_tiled=True))
    assert jnp.allclose(yb, xb - jnp.mean(xb), atol=1e-5, rtol=1e-5)

    print("KERNEL_OK")
</pallas_src>

<mosaic_0001>
module attributes {stable_mosaic.version = 11 : i64} {
  func.func @_fused_center_kernel(%arg0: memref<4x512xf32, #tpu.memory_space<vmem>>, %arg1: memref<4x512xf32, #tpu.memory_space<vmem>>) attributes {dimension_semantics = [], scalar_prefetch = 0 : i64, scratch_operands = 0 : i64, tpu.core_type = #tpu.core_type<tc>} {
    %c0 = arith.constant 0 : index
    %c0_0 = arith.constant 0 : index
    %0 = vector.load %arg0[%c0, %c0_0] : memref<4x512xf32, #tpu.memory_space<vmem>>, vector<4x512xf32>
    %1 = vector.shape_cast %0 : vector<4x512xf32> to vector<1x4x512xf32>
    %cst = arith.constant dense<0.000000e+00> : vector<1xf32>
    %2 = vector.multi_reduction <add>, %1, %cst [1, 2] : vector<1x4x512xf32> to vector<1xf32>
    %3 = vector.shape_cast %2 : vector<1xf32> to vector<1x1x1xf32>
    %4 = vector.extract %3[0, 0, 0] : f32 from vector<1x1x1xf32>
    %cst_1 = arith.constant 4.8828125E-4 : f32
    %5 = arith.mulf %4, %cst_1 : f32
    %6 = vector.broadcast %5 : f32 to vector<4x512xf32>
    %7 = arith.subf %0, %6 : vector<4x512xf32>
    %c0_2 = arith.constant 0 : index
    %c0_3 = arith.constant 0 : index
    %8 = vector.load %arg1[%c0_2, %c0_3] : memref<4x512xf32, #tpu.memory_space<vmem>>, vector<4x512xf32>
    tpu.vector_store %arg1[%c0_2, %c0_3], %7 {strides = array<i32>} : memref<4x512xf32, #tpu.memory_space<vmem>>, vector<4x512xf32>,
    return
  }
}

</mosaic_0001>

<llo_original>
// kernel: tpu_custom_call.1
$region0: #{tpu_custom_call.1}
  #allocation0 [shape = 'u32[]', space=smem, size = 0x4, offset = 0x4, fixed_abs, tag = 'smem constant byte address 0x4 - core index']
  #allocation1 [shape = 'u32[144,128]{1,0:T(1,128)}', space=vmem, size = 0x12000, scoped, tag = 'internal scratch']
  %s0 = inlined_call_operand.hbm [shape: f32[4,512], index: 0, kind: input, shape index: {}]
  %s1 = inlined_call_operand.hbm [shape: f32[4,512], index: 1, kind: output, shape index: {}]
  %s2 = sld [smem:[#allocation0]]
  $region18: #{tpu_custom_call.1} parent=0
    _
  %s4 = ssub.s32 1, %s2
  %s5 = scalar_select 0, %s4, %s2
  $region1: #{tpu_custom_call.1} parent=0
    #allocation2 [shape = 'u8[8192]{0}', space=vmem, size = 0x2000, scoped, tag = 'input window, operand 0, single buffered']
    #allocation3 [shape = 's32[1]{0}', space=sflag, size = 0x4, scoped, tag = 'scoped memory for tpu_custom_call.1']
    #allocation4 [shape = 's32[1]{0}', space=sflag, size = 0x4, scoped, tag = 'scoped memory for tpu_custom_call.1']
    #allocation5 [shape = 'u8[8192]{0}', space=vmem, size = 0x2000, scoped, tag = 'output window, operand 0, single buffered']
    %6 = vsyncpa [#allocation3], 0
    %7 = vsyncpa [#allocation4], 0
    // Predicated region
    $region2: #{tpu_custom_call.1} parent=1 // pred_check
      _
    $region3: #{tpu_custom_call.1} parent=1 // pred_check_branch
      %9 = sbr.rel (0) target = $region5
    $region4: #{tpu_custom_call.1} parent=1 // pred_region
      %s11 = ssub.s32 256, 256
      %12 = vsyncadd [#allocation3], %s11
      %s14 = sshll.u32 [#allocation2], 4
      %s15 = int_to_ptr.vmem [resolvable:$true] %s14
      %17 = dma.hbm_to_vmem [thread:$0]  %s0, 256, %s15, [#allocation3]
    $region5: #{tpu_custom_call.1} parent=1 // pred_fallthru
      _
    // Predicated region
    $region6: #{tpu_custom_call.1} parent=1 // pred_check
      _
    $region7: #{tpu_custom_call.1} parent=1 // pred_check_branch
      %19 = sbr.rel (0) target = $region9
    $region8: #{tpu_custom_call.1} parent=1 // pred_region
      %20 = dma.done [#allocation3], 256
    $region9: #{tpu_custom_call.1} parent=1 // pred_fallthru
      _
    %v21 = vld [vmem:[#allocation2] sm:$0xff]
    %v22 = vld [vmem:[#allocation2 + $0x8] sm:$0xff]
    %v25 = vcombine.high %v21, %v21
    %v26 = vcombine.high %v22, %v22
    %vm29 = vcmask 1043456
    %v30 = vsel %vm29, %v21, 0.0
    %v31 = vsel %vm29, %v25, 0.0
    %v32 = vadd.f32 %v30, %v31
    %v33 = vsel %vm29, %v22, 0.0
    %v34 = vadd.f32 %v32, %v33
    %v35 = vsel %vm29, %v26, 0.0
    %v36 = vadd.f32 %v34, %v35
    %37 = vadd.xlane.f32.xlu0 %v36
    %v38 = vpop.xlane.xlu0 %37
    %v39 = vrot.slane %v38, 4
    %v40 = vadd.f32 %v38, %v39
    %v41 = vrot.slane %v40, 2
    %v42 = vadd.f32 %v40, %v41
    %v43 = vrot.slane %v42, 1
    %v44 = vadd.f32 %v42, %v43
    %s45 = vtos %v44
    %s46 = smul.f32 %s45, 0.00048828125
    %v47 = vstv %s46
    %v48 = vsub.f32 %v21, %v47
    %v49 = vsub.f32 %v22, %v47
    %50 = vst [vmem:[#allocation5] sm:$0xff] %v48
    %51 = vst [vmem:[#allocation5 + $0x8] sm:$0xff] %v49
    // Predicated region
    $region10: #{tpu_custom_call.1} parent=1 // pred_check
      _
    $region11: #{tpu_custom_call.1} parent=1 // pred_check_branch
      %53 = sbr.rel (0) target = $region13
    $region12: #{tpu_custom_call.1} parent=1 // pred_region
      %s55 = ssub.s32 256, 256
      %56 = vsyncadd [#allocation4], %s55
      %s58 = sshll.u32 [#allocation5], 4
      %s59 = int_to_ptr.vmem [resolvable:$true] %s58
      %61 = dma.vmem_to_hbm [thread:$0]  %s59, 256, %s1, [#allocation4]
    $region13: #{tpu_custom_call.1} parent=1 // pred_fallthru
      _
    // Predicated region
    $region14: #{tpu_custom_call.1} parent=1 // pred_check
      _
    $region15: #{tpu_custom_call.1} parent=1 // pred_check_branch
      %63 = sbr.rel (0) target = $region17
    $region16: #{tpu_custom_call.1} parent=1 // pred_region
      %64 = dma.done [#allocation4], 256
    $region17: #{tpu_custom_call.1} parent=1 // pred_fallthru
      _
    %65 = vsyncpa [#allocation3], 1
    %66 = vsyncpa [#allocation4], 1

</llo_original>
